<compile_context>
chip_gen: v5e
topology: v5e:2x2
jax: 0.10.0
libtpu: 0.0.40
codegen_flags: <defaults>
</compile_context>

<pallas_src>
import jax
import jax.numpy as jnp
from jax.experimental import pallas as pl
from jax.experimental.pallas import tpu as pltpu

IN_FEATURES = 784
HIDDEN = 128
NUM_CLASSES = 10
OUT_PAD = 128          # lane-dense output width

DROP_P = 0.2
KEEP_P = 1.0 - DROP_P
NEG_BIG = -1e30        # logit mask for the 118 padded output columns


def _round_up(n, m):
    return ((n + m - 1) // m) * m


def _cdiv(a, b):
    return -(-a // b)


def _choose_tiles(B):
    """Pick (TB, B_pad, n_tiles): TB <= 1024, multiple of 8, padding < TB,
    and at least 2 tiles when there is enough work (keeps both v7x TCs busy)."""
    TB_MAX = 1024
    n_tiles = max(1, _cdiv(B, TB_MAX))
    if n_tiles == 1 and B >= 16:
        n_tiles = 2
    TB = _round_up(_cdiv(B, n_tiles), 8)
    return TB, TB * n_tiles, n_tiles


def _mlp_kernel(x_ref, mask_ref, w1_ref, b1_ref, w2_ref, b2_ref, o_ref):
    # ---- fc1: cast x tile to bf16 in-kernel, MXU dot, f32 accumulate ----
    x_bf = x_ref[...].astype(jnp.bfloat16)               # (TB, 784)
    h = jnp.dot(x_bf, w1_ref[...], preferred_element_type=jnp.float32)
    h = h + b1_ref[...]                                   # (TB,128) + (1,128)
    h = jnp.maximum(h, 0.0)

    # ---- dropout(p=0.2): precomputed scaled keep-mask (0 or 1.25) ----
    h = h * mask_ref[...]

    # ---- fc2 (padded to 128 lanes; padded bias cols are -1e30) ----
    logits = jnp.dot(h.astype(jnp.bfloat16), w2_ref[...],
                     preferred_element_type=jnp.float32)
    logits = logits + b2_ref[...]                          # masks pad columns

    # ---- softmax over the last axis (exact normalization) ----
    m = jnp.max(logits, axis=-1, keepdims=True)
    e = jnp.exp(logits - m)
    denom = jnp.sum(e, axis=-1, keepdims=True)
    o_ref[...] = (e / denom).astype(o_ref.dtype)


def prepare_params(w1, b1, w2, b2):
    """One-time weight prep (outside the per-call jit):
    bf16 weights, f32 biases, fc2 padded to 128 output lanes with zero weight
    columns and -1e30 bias columns (the bias alone masks the padded logits)."""
    w1_p = w1.astype(jnp.bfloat16)                          # (784, 128)
    b1_p = b1.reshape((1, HIDDEN)).astype(jnp.float32)      # (1, 128)

    w2_p = jnp.zeros((HIDDEN, OUT_PAD), jnp.bfloat16)
    w2_p = w2_p.at[:, :NUM_CLASSES].set(w2.astype(jnp.bfloat16))
    b2_p = jnp.full((1, OUT_PAD), NEG_BIG, jnp.float32)
    b2_p = b2_p.at[:, :NUM_CLASSES].set(b2.astype(jnp.float32))
    return w1_p, b1_p, w2_p, b2_p


@jax.jit
def mlp_forward(x, w1_p, b1_p, w2_p, b2_p, key):
    B = x.shape[0]
    x2 = x.reshape((B, IN_FEATURES)).astype(jnp.float32)

    TB, B_pad, n_tiles = _choose_tiles(B)
    if B_pad != B:                                   # static; usually skipped
        x2 = jnp.pad(x2, ((0, B_pad - B), (0, 0)))

    # dropout keep-mask, pre-scaled by 1/(1-p); garbage rows are harmless
    keep = jax.random.bernoulli(key, KEEP_P, (B_pad, HIDDEN))
    mask = keep.astype(jnp.float32) * jnp.float32(1.0 / KEEP_P)

    cost = pl.CostEstimate(
        flops=2 * B_pad * (IN_FEATURES * HIDDEN + HIDDEN * OUT_PAD),
        transcendentals=B_pad * OUT_PAD,
        bytes_accessed=(B_pad * IN_FEATURES * 4          # x (f32)
                        + B_pad * HIDDEN * 4             # dropout mask (f32)
                        + IN_FEATURES * HIDDEN * 2       # w1 (bf16)
                        + HIDDEN * OUT_PAD * 2           # w2 (bf16)
                        + (HIDDEN + OUT_PAD) * 4         # biases (f32)
                        + B_pad * OUT_PAD * 4),          # output (f32)
    )

    out = pl.pallas_call(
        _mlp_kernel,
        out_shape=jax.ShapeDtypeStruct((B_pad, OUT_PAD), jnp.float32),
        grid=(n_tiles,),
        in_specs=[
            pl.BlockSpec((TB, IN_FEATURES), lambda i: (i, 0)),   # x
            pl.BlockSpec((TB, HIDDEN), lambda i: (i, 0)),        # mask
            pl.BlockSpec((IN_FEATURES, HIDDEN), lambda i: (0, 0)),  # w1
            pl.BlockSpec((1, HIDDEN), lambda i: (0, 0)),         # b1
            pl.BlockSpec((HIDDEN, OUT_PAD), lambda i: (0, 0)),   # w2
            pl.BlockSpec((1, OUT_PAD), lambda i: (0, 0)),        # b2
        ],
        out_specs=pl.BlockSpec((TB, OUT_PAD), lambda i: (i, 0)),
        compiler_params=pltpu.CompilerParams(
            dimension_semantics=("parallel",),
            vmem_limit_bytes=32 * 1024 * 1024),
        cost_estimate=cost,
    )(x2, mask, w1_p, b1_p, w2_p, b2_p)

    return out[:B, :NUM_CLASSES]


def init_params(key):
    """Deterministic init mirroring torch.nn.Linear shapes.
    Weights are stored transposed: (in_features, out_features)."""
    k1, k2, k3, k4 = jax.random.split(key, 4)
    lim1 = 1.0 / jnp.sqrt(784.0)
    lim2 = 1.0 / jnp.sqrt(128.0)
    w1 = jax.random.uniform(k1, (784, 128), jnp.float32, -lim1, lim1)
    b1 = jax.random.uniform(k2, (128,), jnp.float32, -lim1, lim1)
    w2 = jax.random.uniform(k3, (128, 10), jnp.float32, -lim2, lim2)
    b2 = jax.random.uniform(k4, (10,), jnp.float32, -lim2, lim2)
    return w1, b1, w2, b2


if __name__ == "__main__":
    key = jax.random.PRNGKey(0)
    k_in, k_params, k_drop = jax.random.split(key, 3)

    B = 8
    # module reshapes to (B, 784); feed MNIST-like (B, 1, 28, 28)
    x = jax.random.normal(k_in, (B, 1, 28, 28), jnp.float32)
    w1, b1, w2, b2 = init_params(k_params)
    w1_p, b1_p, w2_p, b2_p = prepare_params(w1, b1, w2, b2)   # once, at init

    out = mlp_forward(x, w1_p, b1_p, w2_p, b2_p, k_drop)
    out = jax.block_until_ready(out)

    assert out.shape == (B, 10)
    # exact-divide softmax: rows sum to 1 within f32 rounding
    assert jnp.allclose(jnp.sum(out, axis=1), 1.0, atol=1e-3)
    assert bool(jnp.all(out >= 0.0))
    print("KERNEL_OK")
</pallas_src>

<mosaic_0001>
module attributes {stable_mosaic.version = 11 : i64} {
  func.func @_mlp_kernel(%arg0: i32, %arg1: memref<8x784xf32, #tpu.memory_space<vmem>>, %arg2: memref<8x128xf32, #tpu.memory_space<vmem>>, %arg3: memref<784x128xbf16, #tpu.memory_space<vmem>>, %arg4: memref<1x128xf32, #tpu.memory_space<vmem>>, %arg5: memref<128x128xbf16, #tpu.memory_space<vmem>>, %arg6: memref<1x128xf32, #tpu.memory_space<vmem>>, %arg7: memref<8x128xf32, #tpu.memory_space<vmem>>) attributes {dimension_semantics = [#tpu.dimension_semantics<parallel>], iteration_bounds = array<i64: 1>, scalar_prefetch = 0 : i64, scratch_operands = 0 : i64, tpu.core_type = #tpu.core_type<tc>, window_params = [{transform_indices = @transform_0, window_bounds = array<i64: 8, 784>}, {transform_indices = @transform_1, window_bounds = array<i64: 8, 128>}, {pipeline_mode = #tpu.pipeline_mode<synchronous>, transform_indices = @transform_2, window_bounds = array<i64: 784, 128>}, {pipeline_mode = #tpu.pipeline_mode<synchronous>, transform_indices = @transform_3, window_bounds = array<i64: 1, 128>}, {pipeline_mode = #tpu.pipeline_mode<synchronous>, transform_indices = @transform_4, window_bounds = array<i64: 128, 128>}, {pipeline_mode = #tpu.pipeline_mode<synchronous>, transform_indices = @transform_5, window_bounds = array<i64: 1, 128>}, {transform_indices = @transform_6, window_bounds = array<i64: 8, 128>}]} {
    %c0 = arith.constant 0 : index
    %c0_0 = arith.constant 0 : index
    %0 = vector.load %arg1[%c0, %c0_0] : memref<8x784xf32, #tpu.memory_space<vmem>>, vector<8x784xf32>
    %1 = arith.truncf %0 : vector<8x784xf32> to vector<8x784xbf16>
    %c0_1 = arith.constant 0 : index
    %c0_2 = arith.constant 0 : index
    %2 = vector.load %arg3[%c0_1, %c0_2] : memref<784x128xbf16, #tpu.memory_space<vmem>>, vector<784x128xbf16>
    %cst = arith.constant dense<0.000000e+00> : vector<8x128xf32>
    %3 = tpu.matmul %1, %2, %cst {dimension_numbers = #tpu.dot_dimension_numbers<[1], [0], [0], [1], [0, 0, 1, 1], [], []>} : vector<8x784xbf16>, vector<784x128xbf16>, vector<8x128xf32> -> vector<8x128xf32>
    %c0_3 = arith.constant 0 : index
    %c0_4 = arith.constant 0 : index
    %4 = vector.load %arg4[%c0_3, %c0_4] : memref<1x128xf32, #tpu.memory_space<vmem>>, vector<1x128xf32>
    %5 = vector.broadcast %4 : vector<1x128xf32> to vector<8x128xf32>
    %6 = arith.addf %3, %5 : vector<8x128xf32>
    %cst_5 = arith.constant 0.000000e+00 : f32
    %7 = vector.broadcast %cst_5 : f32 to vector<8x128xf32>
    %8 = arith.maximumf %6, %7 : vector<8x128xf32>
    %c0_6 = arith.constant 0 : index
    %c0_7 = arith.constant 0 : index
    %9 = vector.load %arg2[%c0_6, %c0_7] : memref<8x128xf32, #tpu.memory_space<vmem>>, vector<8x128xf32>
    %10 = arith.mulf %8, %9 : vector<8x128xf32>
    %11 = arith.truncf %10 : vector<8x128xf32> to vector<8x128xbf16>
    %c0_8 = arith.constant 0 : index
    %c0_9 = arith.constant 0 : index
    %12 = vector.load %arg5[%c0_8, %c0_9] : memref<128x128xbf16, #tpu.memory_space<vmem>>, vector<128x128xbf16>
    %cst_10 = arith.constant dense<0.000000e+00> : vector<8x128xf32>
    %13 = tpu.matmul %11, %12, %cst_10 {dimension_numbers = #tpu.dot_dimension_numbers<[1], [0], [0], [1], [0, 0, 1, 1], [], []>} : vector<8x128xbf16>, vector<128x128xbf16>, vector<8x128xf32> -> vector<8x128xf32>
    %c0_11 = arith.constant 0 : index
    %c0_12 = arith.constant 0 : index
    %14 = vector.load %arg6[%c0_11, %c0_12] : memref<1x128xf32, #tpu.memory_space<vmem>>, vector<1x128xf32>
    %15 = vector.broadcast %14 : vector<1x128xf32> to vector<8x128xf32>
    %16 = arith.addf %13, %15 : vector<8x128xf32>
    %cst_13 = arith.constant dense<0xFF800000> : vector<8xf32>
    %17 = vector.multi_reduction <maximumf>, %16, %cst_13 [1] : vector<8x128xf32> to vector<8xf32>
    %18 = vector.shape_cast %17 : vector<8xf32> to vector<8x1xf32>
    %19 = vector.broadcast %18 : vector<8x1xf32> to vector<8x128xf32>
    %20 = arith.subf %16, %19 : vector<8x128xf32>
    %21 = math.exp %20 : vector<8x128xf32>
    %cst_14 = arith.constant dense<0.000000e+00> : vector<8xf32>
    %22 = vector.multi_reduction <add>, %21, %cst_14 [1] : vector<8x128xf32> to vector<8xf32>
    %23 = vector.shape_cast %22 : vector<8xf32> to vector<8x1xf32>
    %24 = vector.broadcast %23 : vector<8x1xf32> to vector<8x128xf32>
    %25 = arith.divf %21, %24 : vector<8x128xf32>
    %c0_15 = arith.constant 0 : index
    %c0_16 = arith.constant 0 : index
    %26 = vector.load %arg7[%c0_15, %c0_16] : memref<8x128xf32, #tpu.memory_space<vmem>>, vector<8x128xf32>
    tpu.vector_store %arg7[%c0_15, %c0_16], %25 {strides = array<i32>} : memref<8x128xf32, #tpu.memory_space<vmem>>, vector<8x128xf32>,
    return
  }
  func.func @transform_0(%arg0: i32) -> (i32, i32) {
    %c0_i32 = arith.constant 0 : i32
    %c0_i32_0 = arith.constant 0 : i32
    return %arg0, %c0_i32 : i32, i32
  }
  func.func @transform_1(%arg0: i32) -> (i32, i32) {
    %c0_i32 = arith.constant 0 : i32
    %c0_i32_0 = arith.constant 0 : i32
    return %arg0, %c0_i32 : i32, i32
  }
  func.func @transform_2(%arg0: i32) -> (i32, i32) {
    %c0_i32 = arith.constant 0 : i32
    %c0_i32_0 = arith.constant 0 : i32
    %c0_i32_1 = arith.constant 0 : i32
    return %c0_i32, %c0_i32_0 : i32, i32
  }
  func.func @transform_3(%arg0: i32) -> (i32, i32) {
    %c0_i32 = arith.constant 0 : i32
    %c0_i32_0 = arith.constant 0 : i32
    %c0_i32_1 = arith.constant 0 : i32
    return %c0_i32, %c0_i32_0 : i32, i32
  }
  func.func @transform_4(%arg0: i32) -> (i32, i32) {
    %c0_i32 = arith.constant 0 : i32
    %c0_i32_0 = arith.constant 0 : i32
    %c0_i32_1 = arith.constant 0 : i32
    return %c0_i32, %c0_i32_0 : i32, i32
  }
  func.func @transform_5(%arg0: i32) -> (i32, i32) {
    %c0_i32 = arith.constant 0 : i32
    %c0_i32_0 = arith.constant 0 : i32
    %c0_i32_1 = arith.constant 0 : i32
    return %c0_i32, %c0_i32_0 : i32, i32
  }
  func.func @transform_6(%arg0: i32) -> (i32, i32) {
    %c0_i32 = arith.constant 0 : i32
    %c0_i32_0 = arith.constant 0 : i32
    return %arg0, %c0_i32 : i32, i32
  }
}

</mosaic_0001>

<llo_original>
// kernel: mlp_forward.1
$region0: #{mlp_forward.1}
  #allocation0 [shape = 'u32[]', space=smem, size = 0x4, offset = 0x4, fixed_abs, tag = 'smem constant byte address 0x4 - core index']
  #allocation1 [shape = 'u32[72,128]{1,0:T(1,128)}', space=vmem, size = 0x9000, scoped, tag = 'internal scratch']
  %s0 = inlined_call_operand.vmem [shape: f32[8,784], index: 0, kind: input, shape index: {}]
  %s1 = inlined_call_operand.vmem [shape: f32[8,128], index: 1, kind: input, shape index: {}]
  %s2 = inlined_call_operand.vmem [shape: bf16[784,128], index: 2, kind: input, shape index: {}]
  %s3 = inlined_call_operand.vmem [shape: f32[1,128], index: 3, kind: input, shape index: {}]
  %s4 = inlined_call_operand.vmem [shape: bf16[128,128], index: 4, kind: input, shape index: {}]
  %s5 = inlined_call_operand.vmem [shape: f32[1,128], index: 5, kind: input, shape index: {}]
  %s6 = inlined_call_operand.hbm [shape: f32[8,128], index: 6, kind: output, shape index: {}]
  %s7 = sld [smem:[#allocation0]]
  $region34: #{mlp_forward.1} parent=0
    _
  %s9 = ssub.s32 1, %s7
  %s10 = scalar_select 0, %s9, %s7
  $region1: #{mlp_forward.1} parent=0
    #allocation2 [shape = 'u8[4096]{0}', space=vmem, size = 0x1000, scoped, tag = 'output window, operand 0, single buffered']
    #allocation3 [shape = 's32[1]{0}', space=sflag, size = 0x4, scoped, tag = 'scoped memory for mlp_forward.1']
    %11 = vsyncpa [#allocation3], 0
    // Predicated region
    $region2: #{mlp_forward.1} parent=1 // pred_check
      _
    $region3: #{mlp_forward.1} parent=1 // pred_check_branch
      %13 = sbr.rel (0) target = $region5
    $region4: #{mlp_forward.1} parent=1 // pred_region
      _
    $region5: #{mlp_forward.1} parent=1 // pred_fallthru
      _
    // Predicated region
    $region6: #{mlp_forward.1} parent=1 // pred_check
      _
    $region7: #{mlp_forward.1} parent=1 // pred_check_branch
      %15 = sbr.rel (0) target = $region9
    $region8: #{mlp_forward.1} parent=1 // pred_region
      _
    $region9: #{mlp_forward.1} parent=1 // pred_fallthru
      _
    // Predicated region
    $region10: #{mlp_forward.1} parent=1 // pred_check
      _
    $region11: #{mlp_forward.1} parent=1 // pred_check_branch
      %17 = sbr.rel (0) target = $region13
    $region12: #{mlp_forward.1} parent=1 // pred_region
      _
    $region13: #{mlp_forward.1} parent=1 // pred_fallthru
      _
    // Predicated region
    $region14: #{mlp_forward.1} parent=1 // pred_check
      _
    $region15: #{mlp_forward.1} parent=1 // pred_check_branch
      %19 = sbr.rel (0) target = $region17
    $region16: #{mlp_forward.1} parent=1 // pred_region
      _
    $region17: #{mlp_forward.1} parent=1 // pred_fallthru
      _
    // Predicated region
    $region18: #{mlp_forward.1} parent=1 // pred_check
      _
    $region19: #{mlp_forward.1} parent=1 // pred_check_branch
      %21 = sbr.rel (0) target = $region21
    $region20: #{mlp_forward.1} parent=1 // pred_region
      _
    $region21: #{mlp_forward.1} parent=1 // pred_fallthru
      _
    // Predicated region
    $region22: #{mlp_forward.1} parent=1 // pred_check
      _
    $region23: #{mlp_forward.1} parent=1 // pred_check_branch
      %23 = sbr.rel (0) target = $region25
    $region24: #{mlp_forward.1} parent=1 // pred_region
      _
    $region25: #{mlp_forward.1} parent=1 // pred_fallthru
      _
    %v25 = vld [vmem:[%s0] sm:$0xff]
    %v26 = vld [vmem:[%s0 + $0x8] sm:$0xff]
    %v27 = vld [vmem:[%s0 + $0x10] sm:$0xff]
    %v28 = vld [vmem:[%s0 + $0x18] sm:$0xff]
    %v29 = vld [vmem:[%s0 + $0x20] sm:$0xff]
    %v30 = vld [vmem:[%s0 + $0x28] sm:$0xff]
    %v31 = vld [vmem:[%s0 + $0x30] sm:$0xff]
    %v32 = vpack.c.bf16 %v25, %v25
    %v33 = vpack.c.bf16 %v26, %v26
    %v34 = vpack.c.bf16 %v27, %v27
    %v35 = vpack.c.bf16 %v28, %v28
    %v36 = vpack.c.bf16 %v29, %v29
    %v37 = vpack.c.bf16 %v30, %v30
    %v38 = vpack.c.bf16 %v31, %v31
    %v39 = vld [vmem:[%s2] sm:$0xf]
    %v40 = vld [vmem:[%s2 + $0x4] sm:$0xf]
    %v41 = vld [vmem:[%s2 + $0x8] sm:$0xf]
    %v42 = vld [vmem:[%s2 + $0xc] sm:$0xf]
    %v43 = vld [vmem:[%s2 + $0x10] sm:$0xf]
    %v44 = vld [vmem:[%s2 + $0x14] sm:$0xf]
    %v45 = vld [vmem:[%s2 + $0x18] sm:$0xf]
    %v46 = vld [vmem:[%s2 + $0x1c] sm:$0xf]
    %v47 = vld [vmem:[%s2 + $0x20] sm:$0xf]
    %v48 = vld [vmem:[%s2 + $0x24] sm:$0xf]
    %v49 = vld [vmem:[%s2 + $0x28] sm:$0xf]
    %v50 = vld [vmem:[%s2 + $0x2c] sm:$0xf]
    %v51 = vld [vmem:[%s2 + $0x30] sm:$0xf]
    %v52 = vld [vmem:[%s2 + $0x34] sm:$0xf]
    %v53 = vld [vmem:[%s2 + $0x38] sm:$0xf]
    %v54 = vld [vmem:[%s2 + $0x3c] sm:$0xf]
    %v55 = vld [vmem:[%s2 + $0x40] sm:$0xf]
    %v56 = vld [vmem:[%s2 + $0x44] sm:$0xf]
    %v57 = vld [vmem:[%s2 + $0x48] sm:$0xf]
    %v58 = vld [vmem:[%s2 + $0x4c] sm:$0xf]
    %v59 = vld [vmem:[%s2 + $0x50] sm:$0xf]
    %v60 = vld [vmem:[%s2 + $0x54] sm:$0xf]
    %v61 = vld [vmem:[%s2 + $0x58] sm:$0xf]
    %v62 = vld [vmem:[%s2 + $0x5c] sm:$0xf]
    %v63 = vld [vmem:[%s2 + $0x60] sm:$0xf]
    %v64 = vld [vmem:[%s2 + $0x64] sm:$0xf]
    %v65 = vld [vmem:[%s2 + $0x68] sm:$0xf]
    %v66 = vld [vmem:[%s2 + $0x6c] sm:$0xf]
    %v67 = vld [vmem:[%s2 + $0x70] sm:$0xf]
    %v68 = vld [vmem:[%s2 + $0x74] sm:$0xf]
    %v69 = vld [vmem:[%s2 + $0x78] sm:$0xf]
    %v70 = vld [vmem:[%s2 + $0x7c] sm:$0xf]
    %v71 = vld [vmem:[%s2 + $0x80] sm:$0xf]
    %v72 = vld [vmem:[%s2 + $0x84] sm:$0xf]
    %v73 = vld [vmem:[%s2 + $0x88] sm:$0xf]
    %v74 = vld [vmem:[%s2 + $0x8c] sm:$0xf]
    %v75 = vld [vmem:[%s2 + $0x90] sm:$0xf]
    %v76 = vld [vmem:[%s2 + $0x94] sm:$0xf]
    %v77 = vld [vmem:[%s2 + $0x98] sm:$0xf]
    %v78 = vld [vmem:[%s2 + $0x9c] sm:$0xf]
    %v79 = vld [vmem:[%s2 + $0xa0] sm:$0xf]
    %v80 = vld [vmem:[%s2 + $0xa4] sm:$0xf]
    %v81 = vld [vmem:[%s2 + $0xa8] sm:$0xf]
    %v82 = vld [vmem:[%s2 + $0xac] sm:$0xf]
    %v83 = vld [vmem:[%s2 + $0xb0] sm:$0xf]
    %v84 = vld [vmem:[%s2 + $0xb4] sm:$0xf]
    %v85 = vld [vmem:[%s2 + $0xb8] sm:$0xf]
    %v86 = vld [vmem:[%s2 + $0xbc] sm:$0xf]
    %v87 = vld [vmem:[%s2 + $0xc0] sm:$0xf]
    %v88 = vld [vmem:[%s2 + $0xc4] sm:$0xf]
    %v89 = vld [vmem:[%s2 + $0xc8] sm:$0xf]
    %v90 = vld [vmem:[%s2 + $0xcc] sm:$0xf]
    %v91 = vld [vmem:[%s2 + $0xd0] sm:$0xf]
    %v92 = vld [vmem:[%s2 + $0xd4] sm:$0xf]
    %v93 = vld [vmem:[%s2 + $0xd8] sm:$0xf]
    %v94 = vld [vmem:[%s2 + $0xdc] sm:$0xf]
    %v95 = vld [vmem:[%s2 + $0xe0] sm:$0xf]
    %v96 = vld [vmem:[%s2 + $0xe4] sm:$0xf]
    %v97 = vld [vmem:[%s2 + $0xe8] sm:$0xf]
    %v98 = vld [vmem:[%s2 + $0xec] sm:$0xf]
    %v99 = vld [vmem:[%s2 + $0xf0] sm:$0xf]
    %v100 = vld [vmem:[%s2 + $0xf4] sm:$0xf]
    %v101 = vld [vmem:[%s2 + $0xf8] sm:$0xf]
    %v102 = vld [vmem:[%s2 + $0xfc] sm:$0xf]
    %v103 = vld [vmem:[%s2 + $0x100] sm:$0xf]
    %v104 = vld [vmem:[%s2 + $0x104] sm:$0xf]
    %v105 = vld [vmem:[%s2 + $0x108] sm:$0xf]
    %v106 = vld [vmem:[%s2 + $0x10c] sm:$0xf]
    %v107 = vld [vmem:[%s2 + $0x110] sm:$0xf]
    %v108 = vld [vmem:[%s2 + $0x114] sm:$0xf]
    %v109 = vld [vmem:[%s2 + $0x118] sm:$0xf]
    %v110 = vld [vmem:[%s2 + $0x11c] sm:$0xf]
    %v111 = vld [vmem:[%s2 + $0x120] sm:$0xf]
    %v112 = vld [vmem:[%s2 + $0x124] sm:$0xf]
    %v113 = vld [vmem:[%s2 + $0x128] sm:$0xf]
    %v114 = vld [vmem:[%s2 + $0x12c] sm:$0xf]
    %v115 = vld [vmem:[%s2 + $0x130] sm:$0xf]
    %v116 = vld [vmem:[%s2 + $0x134] sm:$0xf]
    %v117 = vld [vmem:[%s2 + $0x138] sm:$0xf]
    %v118 = vld [vmem:[%s2 + $0x13c] sm:$0xf]
    %v119 = vld [vmem:[%s2 + $0x140] sm:$0xf]
    %v120 = vld [vmem:[%s2 + $0x144] sm:$0xf]
    %v121 = vld [vmem:[%s2 + $0x148] sm:$0xf]
    %v122 = vld [vmem:[%s2 + $0x14c] sm:$0xf]
    %v123 = vld [vmem:[%s2 + $0x150] sm:$0xf]
    %v124 = vld [vmem:[%s2 + $0x154] sm:$0xf]
    %v125 = vld [vmem:[%s2 + $0x158] sm:$0xf]
    %v126 = vld [vmem:[%s2 + $0x15c] sm:$0xf]
    %v127 = vld [vmem:[%s2 + $0x160] sm:$0xf]
    %v128 = vld [vmem:[%s2 + $0x164] sm:$0xf]
    %v129 = vld [vmem:[%s2 + $0x168] sm:$0xf]
    %v130 = vld [vmem:[%s2 + $0x16c] sm:$0xf]
    %v131 = vld [vmem:[%s2 + $0x170] sm:$0xf]
    %v132 = vld [vmem:[%s2 + $0x174] sm:$0xf]
    %v133 = vld [vmem:[%s2 + $0x178] sm:$0xf]
    %v134 = vld [vmem:[%s2 + $0x17c] sm:$0xf]
    %v135 = vld [vmem:[%s2 + $0x180] sm:$0xf]
    %v136 = vld [vmem:[%s2 + $0x184] sm:$0xf]
    %v137 = vld [vmem:[%s3] sm:$0x1]
    %v139 = vperm.slane %v137, 0
    %v239 = vunpack.c.l.b16 %v39
    %v240 = vunpack.c.l.b16 %v40
    %v241 = vunpack.c.l.b16 %v41
    %v242 = vunpack.c.l.b16 %v42
    %v243 = vunpack.c.l.b16 %v43
    %v244 = vunpack.c.l.b16 %v44
    %v245 = vunpack.c.l.b16 %v45
    %v246 = vunpack.c.l.b16 %v46
    %v247 = vunpack.c.l.b16 %v47
    %v248 = vunpack.c.l.b16 %v48
    %v249 = vunpack.c.l.b16 %v49
    %v250 = vunpack.c.l.b16 %v50
    %v251 = vunpack.c.l.b16 %v51
    %v252 = vunpack.c.l.b16 %v52
    %v253 = vunpack.c.l.b16 %v53
    %v254 = vunpack.c.l.b16 %v54
    %v255 = vunpack.c.l.b16 %v55
    %v256 = vunpack.c.l.b16 %v56
    %v257 = vunpack.c.l.b16 %v57
    %v258 = vunpack.c.l.b16 %v58
    %v259 = vunpack.c.l.b16 %v59
    %v260 = vunpack.c.l.b16 %v60
    %v261 = vunpack.c.l.b16 %v61
    %v262 = vunpack.c.l.b16 %v62
    %v263 = vunpack.c.l.b16 %v63
    %v264 = vunpack.c.l.b16 %v64
    %v265 = vunpack.c.l.b16 %v65
    %v266 = vunpack.c.l.b16 %v66
    %v267 = vunpack.c.l.b16 %v67
    %v268 = vunpack.c.l.b16 %v68
    %v269 = vunpack.c.l.b16 %v69
    %v270 = vunpack.c.l.b16 %v70
    %v271 = vunpack.c.l.b16 %v71
    %v272 = vunpack.c.l.b16 %v72
    %v273 = vunpack.c.l.b16 %v73
    %v274 = vunpack.c.l.b16 %v74
    %v275 = vunpack.c.l.b16 %v75
    %v276 = vunpack.c.l.b16 %v76
    %v277 = vunpack.c.l.b16 %v77
    %v278 = vunpack.c.l.b16 %v78
    %v279 = vunpack.c.l.b16 %v79
    %v280 = vunpack.c.l.b16 %v80
    %v281 = vunpack.c.l.b16 %v81
    %v282 = vunpack.c.l.b16 %v82
    %v283 = vunpack.c.l.b16 %v83
    %v284 = vunpack.c.l.b16 %v84
    %v285 = vunpack.c.l.b16 %v85
    %v286 = vunpack.c.l.b16 %v86
    %v287 = vunpack.c.l.b16 %v87
    %v288 = vunpack.c.l.b16 %v88
    %v289 = vunpack.c.l.b16 %v89
    %v290 = vunpack.c.l.b16 %v90
    %v291 = vunpack.c.l.b16 %v91
    %v292 = vunpack.c.l.b16 %v92
    %v293 = vunpack.c.l.b16 %v93
    %v294 = vunpack.c.l.b16 %v94
    %v295 = vunpack.c.l.b16 %v95
    %v296 = vunpack.c.l.b16 %v96
    %v297 = vunpack.c.l.b16 %v97
    %v298 = vunpack.c.l.b16 %v98
    %v299 = vunpack.c.l.b16 %v99
    %v300 = vunpack.c.l.b16 %v100
    %v301 = vunpack.c.l.b16 %v101
    %v302 = vunpack.c.l.b16 %v102
    %v303 = vunpack.c.l.b16 %v103
    %v304 = vunpack.c.l.b16 %v104
    %v305 = vunpack.c.l.b16 %v105
    %v306 = vunpack.c.l.b16 %v106
    %v307 = vunpack.c.l.b16 %v107
    %v308 = vunpack.c.l.b16 %v108
    %v309 = vunpack.c.l.b16 %v109
    %v310 = vunpack.c.l.b16 %v110
    %v311 = vunpack.c.l.b16 %v111
    %v312 = vunpack.c.l.b16 %v112
    %v313 = vunpack.c.l.b16 %v113
    %v314 = vunpack.c.l.b16 %v114
    %v315 = vunpack.c.l.b16 %v115
    %v316 = vunpack.c.l.b16 %v116
    %v317 = vunpack.c.l.b16 %v117
    %v318 = vunpack.c.l.b16 %v118
    %v319 = vunpack.c.l.b16 %v119
    %v320 = vunpack.c.l.b16 %v120
    %v321 = vunpack.c.l.b16 %v121
    %v322 = vunpack.c.l.b16 %v122
    %v323 = vunpack.c.l.b16 %v123
    %v324 = vunpack.c.l.b16 %v124
    %v325 = vunpack.c.l.b16 %v125
    %v326 = vunpack.c.l.b16 %v126
    %v327 = vunpack.c.l.b16 %v127
    %v328 = vunpack.c.l.b16 %v128
    %v329 = vunpack.c.l.b16 %v129
    %v330 = vunpack.c.l.b16 %v130
    %v331 = vunpack.c.l.b16 %v131
    %v332 = vunpack.c.l.b16 %v132
    %v333 = vunpack.c.l.b16 %v133
    %v334 = vunpack.c.l.b16 %v134
    %v335 = vunpack.c.l.b16 %v135
    %v336 = vunpack.c.l.b16 %v136
    %v337 = vpack.c.b16 %v240, %v239
    %v338 = vpack.c.b16 %v242, %v241
    %v339 = vpack.c.b16 %v244, %v243
    %v340 = vpack.c.b16 %v246, %v245
    %v341 = vpack.c.b16 %v248, %v247
    %v342 = vpack.c.b16 %v250, %v249
    %v343 = vpack.c.b16 %v252, %v251
    %v344 = vpack.c.b16 %v254, %v253
    %v345 = vpack.c.b16 %v256, %v255
    %v346 = vpack.c.b16 %v258, %v257
    %v347 = vpack.c.b16 %v260, %v259
    %v348 = vpack.c.b16 %v262, %v261
    %v349 = vpack.c.b16 %v264, %v263
    %v350 = vpack.c.b16 %v266, %v265
    %v351 = vpack.c.b16 %v268, %v267
    %v352 = vpack.c.b16 %v270, %v269
    %v353 = vpack.c.b16 %v272, %v271
    %v354 = vpack.c.b16 %v274, %v273
    %v355 = vpack.c.b16 %v276, %v275
    %v356 = vpack.c.b16 %v278, %v277
    %v357 = vpack.c.b16 %v280, %v279
    %v358 = vpack.c.b16 %v282, %v281
    %v359 = vpack.c.b16 %v284, %v283
    %v360 = vpack.c.b16 %v286, %v285
    %v361 = vpack.c.b16 %v288, %v287
    %v362 = vpack.c.b16 %v290, %v289
    %v363 = vpack.c.b16 %v292, %v291
    %v364 = vpack.c.b16 %v294, %v293
    %v365 = vpack.c.b16 %v296, %v295
    %v366 = vpack.c.b16 %v298, %v297
    %v367 = vpack.c.b16 %v300, %v299
    %v368 = vpack.c.b16 %v302, %v301
    %v369 = vpack.c.b16 %v304, %v303
    %v370 = vpack.c.b16 %v306, %v305
    %v371 = vpack.c.b16 %v308, %v307
    %v372 = vpack.c.b16 %v310, %v309
    %v373 = vpack.c.b16 %v312, %v311
    %v374 = vpack.c.b16 %v314, %v313
    %v375 = vpack.c.b16 %v316, %v315
    %v376 = vpack.c.b16 %v318, %v317
    %v377 = vpack.c.b16 %v320, %v319
    %v378 = vpack.c.b16 %v322, %v321
    %v379 = vpack.c.b16 %v324, %v323
    %v380 = vpack.c.b16 %v326, %v325
    %v381 = vpack.c.b16 %v328, %v327
    %v382 = vpack.c.b16 %v330, %v329
    %v383 = vpack.c.b16 %v332, %v331
    %v384 = vpack.c.b16 %v334, %v333
    %v385 = vpack.c.b16 %v336, %v335
    %vm435 = vcmask 130048
    %v437 = vsel %vm435, %v38, 0
    %439 = vmatpush.bf16.msra.mxu0 %v344
    %440 = vmatpush.bf16.msra.mxu0 %v343
    %441 = vmatpush.bf16.msra.mxu0 %v342
    %442 = vmatpush.bf16.msra.mxu0 %v341
    %443 = vmatpush.bf16.msra.mxu0 %v340
    %444 = vmatpush.bf16.msra.mxu0 %v339
    %445 = vmatpush.bf16.msra.mxu0 %v338
    %446 = vmatpush.bf16.msra.mxu0 %v337
    %447 = vmatmul.bf16.gmra.mxu0 %v32
    %v448 = vpop.f32.mrf.mxu0
    %v449 = vadd.f32 %v139, %v448
    %v450 = vpop.f32.mrf.mxu0
    %451 = vdwg.mxu0
    %452 = vmatpush.bf16.msra.mxu0 %v352
    %453 = vmatpush.bf16.msra.mxu0 %v351
    %454 = vmatpush.bf16.msra.mxu0 %v350
    %455 = vmatpush.bf16.msra.mxu0 %v349
    %456 = vmatpush.bf16.msra.mxu0 %v348
    %457 = vmatpush.bf16.msra.mxu0 %v347
    %458 = vmatpush.bf16.msra.mxu0 %v346
    %459 = vmatpush.bf16.msra.mxu0 %v345
    %460 = vmatmul.bf16.gmra.mxu0 %v33
    %v461 = vpop.f32.mrf.mxu0
    %v462 = vadd.f32 %v449, %v461
    %v463 = vpop.f32.mrf.mxu0
    %464 = vdwg.mxu0
    %465 = vmatpush.bf16.msra.mxu0 %v360
    %466 = vmatpush.bf16.msra.mxu0 %v359
    %467 = vmatpush.bf16.msra.mxu0 %v358
    %468 = vmatpush.bf16.msra.mxu0 %v357
    %469 = vmatpush.bf16.msra.mxu0 %v356
    %470 = vmatpush.bf16.msra.mxu0 %v355
    %471 = vmatpush.bf16.msra.mxu0 %v354
    %472 = vmatpush.bf16.msra.mxu0 %v353
    %473 = vmatmul.bf16.gmra.mxu0 %v34
    %v474 = vpop.f32.mrf.mxu0
    %v475 = vadd.f32 %v462, %v474
    %v476 = vpop.f32.mrf.mxu0
    %477 = vdwg.mxu0
    %478 = vmatpush.bf16.msra.mxu0 %v368
    %479 = vmatpush.bf16.msra.mxu0 %v367
    %480 = vmatpush.bf16.msra.mxu0 %v366
    %481 = vmatpush.bf16.msra.mxu0 %v365
    %482 = vmatpush.bf16.msra.mxu0 %v364
    %483 = vmatpush.bf16.msra.mxu0 %v363
    %484 = vmatpush.bf16.msra.mxu0 %v362
    %485 = vmatpush.bf16.msra.mxu0 %v361
    %486 = vmatmul.bf16.gmra.mxu0 %v35
    %v487 = vpop.f32.mrf.mxu0
    %v488 = vadd.f32 %v475, %v487
    %v489 = vpop.f32.mrf.mxu0
    %490 = vdwg.mxu0
    %491 = vmatpush.bf16.msra.mxu0 %v376
    %492 = vmatpush.bf16.msra.mxu0 %v375
    %493 = vmatpush.bf16.msra.mxu0 %v374
    %494 = vmatpush.bf16.msra.mxu0 %v373
    %495 = vmatpush.bf16.msra.mxu0 %v372
    %496 = vmatpush.bf16.msra.mxu0 %v371
    %497 = vmatpush.bf16.msra.mxu0 %v370
    %498 = vmatpush.bf16.msra.mxu0 %v369
    %499 = vmatmul.bf16.gmra.mxu0 %v36
    %v500 = vpop.f32.mrf.mxu0
    %v501 = vadd.f32 %v488, %v500
    %v502 = vpop.f32.mrf.mxu0
    %503 = vdwg.mxu0
    %504 = vmatpush.bf16.msra.mxu0 %v384
    %505 = vmatpush.bf16.msra.mxu0 %v383
    %506 = vmatpush.bf16.msra.mxu0 %v382
    %507 = vmatpush.bf16.msra.mxu0 %v381
    %508 = vmatpush.bf16.msra.mxu0 %v380
    %509 = vmatpush.bf16.msra.mxu0 %v379
    %510 = vmatpush.bf16.msra.mxu0 %v378
    %511 = vmatpush.bf16.msra.mxu0 %v377
    %512 = vmatmul.bf16.gmra.mxu0 %v37
    %v513 = vpop.f32.mrf.mxu0
    %v514 = vadd.f32 %v501, %v513
    %v515 = vpop.f32.mrf.mxu0
    %516 = vdwg.mxu0
    %517 = vmatpush.bf16.msra.mxu0 0
    %518 = vmatpush.bf16.msra.mxu0 0
    %519 = vmatpush.bf16.msra.mxu0 0
    %520 = vmatpush.bf16.msra.mxu0 0
    %521 = vmatpush.bf16.msra.mxu0 0
    %522 = vmatpush.bf16.msra.mxu0 0
    %523 = vmatpush.bf16.msra.mxu0 0
    %524 = vmatpush.bf16.msra.mxu0 %v385
    %525 = vmatmul.bf16.gmra.mxu0 %v437
    %v526 = vpop.f32.mrf.mxu0
    %v527 = vadd.f32 %v514, %v526
    %v528 = vpop.f32.mrf.mxu0
    %529 = vdwg.mxu0
    %v530 = vmax.f32 %v527, 0.0
    %v531 = vld [vmem:[%s1] sm:$0xff]
    %v532 = vmul.f32 %v530, %v531
    %v533 = vpack.c.bf16 %v532, %v532
    %v534 = vld [vmem:[%s4] sm:$0xf]
    %v535 = vld [vmem:[%s4 + $0x4] sm:$0xf]
    %v536 = vld [vmem:[%s4 + $0x8] sm:$0xf]
    %v537 = vld [vmem:[%s4 + $0xc] sm:$0xf]
    %v538 = vld [vmem:[%s4 + $0x10] sm:$0xf]
    %v539 = vld [vmem:[%s4 + $0x14] sm:$0xf]
    %v540 = vld [vmem:[%s4 + $0x18] sm:$0xf]
    %v541 = vld [vmem:[%s4 + $0x1c] sm:$0xf]
    %v542 = vld [vmem:[%s4 + $0x20] sm:$0xf]
    %v543 = vld [vmem:[%s4 + $0x24] sm:$0xf]
    %v544 = vld [vmem:[%s4 + $0x28] sm:$0xf]
    %v545 = vld [vmem:[%s4 + $0x2c] sm:$0xf]
    %v546 = vld [vmem:[%s4 + $0x30] sm:$0xf]
    %v547 = vld [vmem:[%s4 + $0x34] sm:$0xf]
    %v548 = vld [vmem:[%s4 + $0x38] sm:$0xf]
    %v549 = vld [vmem:[%s4 + $0x3c] sm:$0xf]
    %v550 = vld [vmem:[%s5] sm:$0x1]
    %v552 = vperm.slane %v550, 0
    %v570 = vunpack.c.l.b16 %v534
    %v571 = vunpack.c.l.b16 %v535
    %v572 = vunpack.c.l.b16 %v536
    %v573 = vunpack.c.l.b16 %v537
    %v574 = vunpack.c.l.b16 %v538
    %v575 = vunpack.c.l.b16 %v539
    %v576 = vunpack.c.l.b16 %v540
    %v577 = vunpack.c.l.b16 %v541
    %v578 = vunpack.c.l.b16 %v542
    %v579 = vunpack.c.l.b16 %v543
    %v580 = vunpack.c.l.b16 %v544
    %v581 = vunpack.c.l.b16 %v545
    %v582 = vunpack.c.l.b16 %v546
    %v583 = vunpack.c.l.b16 %v547
    %v584 = vunpack.c.l.b16 %v548
    %v585 = vunpack.c.l.b16 %v549
    %v586 = vpack.c.b16 %v571, %v570
    %v587 = vpack.c.b16 %v573, %v572
    %v588 = vpack.c.b16 %v575, %v574
    %v589 = vpack.c.b16 %v577, %v576
    %v590 = vpack.c.b16 %v579, %v578
    %v591 = vpack.c.b16 %v581, %v580
    %v592 = vpack.c.b16 %v583, %v582
    %v593 = vpack.c.b16 %v585, %v584
    %602 = vmatpush.bf16.msra.mxu0 %v593
    %603 = vmatpush.bf16.msra.mxu0 %v592
    %604 = vmatpush.bf16.msra.mxu0 %v591
    %605 = vmatpush.bf16.msra.mxu0 %v590
    %606 = vmatpush.bf16.msra.mxu0 %v589
    %607 = vmatpush.bf16.msra.mxu0 %v588
    %608 = vmatpush.bf16.msra.mxu0 %v587
    %609 = vmatpush.bf16.msra.mxu0 %v586
    %610 = vmatmul.bf16.gmra.mxu0 %v533
    %v611 = vpop.f32.mrf.mxu0
    %v612 = vadd.f32 %v552, %v611
    %v613 = vpop.f32.mrf.mxu0
    %614 = vdwg.mxu0
    %615 = vmax.xlane.f32.xlu0 %v612
    %v616 = vpop.xlane.xlu0 %615
    %v617 = vsub.f32 %v612, %v616
    %v618 = vmul.f32 %v617, 1.442695
    %v619 = vpow.pop %v618
    %620 = vadd.xlane.f32.xlu0 %v619
    %v621 = vpop.xlane.xlu0 %620
    %v622 = vrcp.pop %v621
    %v623 = vmul.f32 %v621, %v622
    %v624 = vsub.f32 1.0, %v623
    %v625 = vmul.f32 %v622, %v624
    %v626 = vadd.f32 %v622, %v625
    %vm627 = vweird.f32 %v621
    %vm628 = vweird.f32 %v622
    %vm629 = vmor %vm627, %vm628
    %v630 = vsel %vm629, %v622, %v626
    %v631 = vand.u32 2147483647, %v621
    %vm632 = vcmp.eq.f32.partialorder %v631, 8.507059e+37
    %v633 = vand.u32 %v621, 2147483648
    %v634 = vor.u32 1.1754944e-38, %v633
    %v635 = vsel %vm632, %v634, %v630
    %v636 = vmul.f32 %v619, %v635
    %637 = vst [vmem:[#allocation2] sm:$0xff] %v636
    // Predicated region
    $region26: #{mlp_forward.1} parent=1 // pred_check
      _
    $region27: #{mlp_forward.1} parent=1 // pred_check_branch
      %639 = sbr.rel (0) target = $region29
    $region28: #{mlp_forward.1} parent=1 // pred_region
      %641 = vsyncadd [#allocation3], 0
      %s643 = sshll.u32 [#allocation2], 4
      %s644 = int_to_ptr.vmem [resolvable:$true] %s643
      %s645 = sshll.u32 %s6, 4
      %s646 = int_to_ptr.hbm [resolvable:$true] %s645
      %648 = dma.vmem_to_hbm [thread:$0]  %s644, 128, %s646, [#allocation3]
    $region29: #{mlp_forward.1} parent=1 // pred_fallthru
      _
    // Predicated region
    $region30: #{mlp_forward.1} parent=1 // pred_check
      _
    $region31: #{mlp_forward.1} parent=1 // pred_check_branch
      %650 = sbr.rel (0) target = $region33
    $region32: #{mlp_forward.1} parent=1 // pred_region
      %652 = dma.done [#allocation3], 128
    $region33: #{mlp_forward.1} parent=1 // pred_fallthru
      _
    %653 = vsyncpa [#allocation3], 1

</llo_original>
